<compile_context>
chip_gen: v7x
topology: tpu7x:2x2x1
jax: 0.10.0
libtpu: 0.0.40
codegen_flags: <defaults>
</compile_context>

<pallas_src>
import numpy as np
import jax
import jax.numpy as jnp
from jax import lax
from jax.experimental import pallas as pl
from jax.experimental.pallas import tpu as pltpu


def _round_up(n, m):
    return ((n + m - 1) // m) * m


# --------------------------------------------------------------------------
# Kernel 1: regressor MLP  (N, D) -> (N, 1)
#   Linear(D,512) -> ReLU -> [Dropout=id] -> fused Linear(512,1) -> Sigmoid
# --------------------------------------------------------------------------
def mlp_kernel(x_ref, w1_ref, b1_ref, w23_ref, b23_ref, o_ref):
    # In-kernel bf16 cast (x stays f32 in HBM; no extra wrapper pass).
    x = x_ref[...].astype(jnp.bfloat16)
    h = jnp.dot(x, w1_ref[...], preferred_element_type=jnp.float32)
    h = jnp.maximum(h + b1_ref[...], 0.0)
    # Dropouts are identity in eval; Linear(512,32)+Linear(32,1) were pre-fused
    # into a single (1,512) row in the wrapper.  A (512,1) RHS would waste the
    # MXU, so do the projection on the VPU + one lane reduce instead.
    s = jnp.sum(h * w23_ref[...], axis=1, keepdims=True)
    o_ref[...] = jax.nn.sigmoid(s + b23_ref[0, 0])


def _mlp_vmem_bytes(tm, D, H1):
    return (2 * tm * D * 4       # f32 x tile, double-buffered
            + tm * D * 2         # in-kernel bf16 copy of the x tile
            + 2 * D * H1 * 2     # bf16 w1, double-buffered (grid-invariant)
            + 2 * H1 * 4         # b1
            + 2 * H1 * 4         # w23 row
            + tm * H1 * 4        # f32 hidden activations
            + 2 * tm * 4)        # output column, double-buffered


def _pick_tm(n_rows, D, H1, tm_req, budget_bytes):
    tm = min(tm_req, _round_up(n_rows, 8))
    if n_rows > 128:
        # Keep >= 2 grid steps so both v7x TensorCores get work.
        tm = min(tm, _round_up(pl.cdiv(n_rows, 2), 128))
    # Shrink the tile until its working set fits the scoped-VMEM budget
    # (matters for large D and for v7x's 64 MiB physical VMEM).
    while tm > 128 and _mlp_vmem_bytes(tm, D, H1) > budget_bytes:
        tm //= 2
    return max(tm, 8)


def run_mlp(x_flat, w1, b1, w23_row, b23, *, tm=512,
            vmem_limit_bytes=32 * 1024 * 1024):
    """x_flat: (N, D) f32 -> (N, 1) f32 sigmoid scores."""
    N, D = x_flat.shape
    H1 = w1.shape[1]
    tm = _pick_tm(N, D, H1, tm, int(0.75 * vmem_limit_bytes))

    return pl.pallas_call(
        mlp_kernel,
        out_shape=jax.ShapeDtypeStruct((N, 1), jnp.float32),
        grid_spec=pltpu.PrefetchScalarGridSpec(
            num_scalar_prefetch=0,
            grid=(pl.cdiv(N, tm),),          # no jnp.pad: tail block is masked
            in_specs=[
                pl.BlockSpec((tm, D), lambda i: (i, 0)),
                pl.BlockSpec((D, H1), lambda i: (0, 0)),
                pl.BlockSpec((1, H1), lambda i: (0, 0)),
                pl.BlockSpec((1, H1), lambda i: (0, 0)),
                # b23 is a true scalar: keep it on the scalar path.
                pl.BlockSpec(memory_space=pltpu.MemorySpace.SMEM),
            ],
            out_specs=pl.BlockSpec((tm, 1), lambda i: (i, 0)),
        ),
        compiler_params=pltpu.CompilerParams(
            dimension_semantics=("parallel",),
            vmem_limit_bytes=vmem_limit_bytes,
        ),
    )(x_flat, w1, b1, w23_row, b23)


# --------------------------------------------------------------------------
# Kernel 2: top-k mean filter.  Processes tb bags per grid step.
#   k = seq_len[b] // 16 + 1 over the first seq_len[b] scores of each bag.
#   Iterative max extraction; the second (index) reduce is kept because it is
#   what makes tie handling exact (duplicate instances are common in MIL
#   padding); key-packing tricks would perturb the accumulated values.
#   Assumes seq_len[b] >= 1 (matches torch.topk semantics in the spec).
# --------------------------------------------------------------------------
def filter_kernel(sl_ref, logits_ref, out_ref):
    tb, T = logits_ref.shape
    kmax = T // 16 + 1                       # static upper bound on k
    NEG = jnp.float32(-1e30)

    sl = sl_ref[...]                         # (tb, 1) int32
    k = sl // 16 + 1                         # (tb, 1) int32
    row = logits_ref[...]                    # (tb, T) f32
    idx = lax.broadcasted_iota(jnp.int32, row.shape, 1)
    vals0 = jnp.where(idx < sl, row, NEG)    # mask padding beyond seq_len

    def body(i, carry):
        vals, acc = carry
        m = jnp.max(vals, axis=1, keepdims=True)                           # (tb,1)
        is_max = vals == m
        first = jnp.min(jnp.where(is_max, idx, T), axis=1, keepdims=True)  # (tb,1)
        vals = jnp.where(idx == first, NEG, vals)                          # pop one per row
        acc = acc + jnp.where(i < k, m, 0.0)
        return vals, acc

    _, acc = lax.fori_loop(
        0, kmax, body,
        (vals0, jnp.zeros((tb, 1), jnp.float32)),
        unroll=min(4, kmax),                 # partial unroll: LLO interleave
    )
    out_ref[...] = acc / k.astype(jnp.float32)


def run_filter(logits, seq_len, *, tb=128):
    """logits: (B, T) f32, seq_len: (B,) int -> (B,) f32."""
    B, T = logits.shape
    tb = min(tb, _round_up(B, 8))
    sl2d = seq_len.astype(jnp.int32).reshape(B, 1)

    out = pl.pallas_call(
        filter_kernel,
        out_shape=jax.ShapeDtypeStruct((B, 1), jnp.float32),
        grid_spec=pltpu.PrefetchScalarGridSpec(
            num_scalar_prefetch=0,
            grid=(pl.cdiv(B, tb),),          # no pad: tail bags masked on store
            in_specs=[
                pl.BlockSpec((tb, 1), lambda i: (i, 0)),
                pl.BlockSpec((tb, T), lambda i: (i, 0)),
            ],
            out_specs=pl.BlockSpec((tb, 1), lambda i: (i, 0)),
        ),
        compiler_params=pltpu.CompilerParams(
            dimension_semantics=("parallel",)),   # bags independent (v7x 2 TCs)
    )(sl2d, logits)
    return out[:, 0]


# --------------------------------------------------------------------------
# Wrapper: full MIL forward
# --------------------------------------------------------------------------
def mil_forward(avf_out, seq_len, params, *, tm=512, tb=128):
    w1, b1, w2, b2, w3, b3 = params
    H1 = w1.shape[1]
    # Fuse Linear(512,32) -> Linear(32,1): eval mode, no nonlinearity between.
    w23_row = jnp.dot(w2, w3).reshape(1, H1)       # (1, 512) f32 (VPU path)
    b23 = (jnp.dot(b2, w3) + b3).reshape(1, 1)     # (1, 1) scalar (SMEM)

    B, T, D = avf_out.shape
    x_flat = avf_out.reshape(B * T, D)             # stays f32; bf16 cast in-kernel
    logits = run_mlp(
        x_flat,
        w1.astype(jnp.bfloat16), b1.astype(jnp.float32),
        w23_row.astype(jnp.float32), b23.astype(jnp.float32),
        tm=tm,
    ).reshape(B, T)                                # squeeze() of (B, T, 1)
    return run_filter(logits, seq_len, tb=tb)      # (B,)


# --------------------------------------------------------------------------
# Deterministic parameter init (synthetic, PyTorch Linear-style uniform)
# --------------------------------------------------------------------------
def init_params(key, input_dim):
    dims = [(input_dim, 512), (512, 32), (32, 1)]
    params = []
    for i, (fan_in, fan_out) in enumerate(dims):
        kw, kb = jax.random.split(jax.random.fold_in(key, i))
        bound = 1.0 / np.sqrt(fan_in)
        w = jax.random.uniform(kw, (fan_in, fan_out), jnp.float32, -bound, bound)
        b = jax.random.uniform(kb, (1, fan_out), jnp.float32, -bound, bound)
        params += [w, b]
    return tuple(params)


# --------------------------------------------------------------------------
# Reference for correctness check (same bf16 operand rounding, f32 accumulate)
# --------------------------------------------------------------------------
def ref_forward(avf_out, seq_len, params):
    w1, b1, w2, b2, w3, b3 = params
    w23 = jnp.dot(w2, w3)
    b23 = jnp.dot(b2, w3) + b3
    B, T, D = avf_out.shape
    x = avf_out.reshape(B * T, D).astype(jnp.bfloat16)
    h = jnp.dot(x, w1.astype(jnp.bfloat16),
                preferred_element_type=jnp.float32) + b1
    h = jnp.maximum(h, 0.0)
    s = jnp.dot(h, w23) + b23                      # f32, like the kernel VPU path
    logits = np.asarray(jax.nn.sigmoid(s), dtype=np.float32).reshape(B, T)

    seq_len = np.asarray(seq_len)
    out = []
    for i in range(B):
        sl = int(seq_len[i])
        k = sl // 16 + 1
        top = np.sort(logits[i, :sl])[::-1][:k]
        out.append(top.mean())
    return np.array(out, dtype=np.float32)


if __name__ == "__main__":
    B, T, D = 2, 16, 32            # 2 bags, 16 instances each, feature dim 32
    key = jax.random.PRNGKey(0)
    kx, kp = jax.random.split(key)

    avf_out = jax.random.normal(kx, (B, T, D), jnp.float32)
    seq_len = jnp.array([16, 12], jnp.int32)
    params = init_params(kp, D)

    out = mil_forward(avf_out, seq_len, params)
    out = jax.block_until_ready(out)

    ref = ref_forward(avf_out, seq_len, params)
    assert out.shape == (B,)
    assert np.allclose(np.asarray(out), ref, atol=1e-4, rtol=1e-4), (out, ref)
    print("KERNEL_OK")
</pallas_src>

<mosaic_0001>
module attributes {stable_mosaic.version = 11 : i64} {
  func.func @mlp_kernel(%arg0: i32, %arg1: memref<32x32xf32, #tpu.memory_space<vmem>>, %arg2: memref<32x512xbf16, #tpu.memory_space<vmem>>, %arg3: memref<1x512xf32, #tpu.memory_space<vmem>>, %arg4: memref<1x512xf32, #tpu.memory_space<vmem>>, %arg5: memref<1x1xf32, #tpu.memory_space<smem>>, %arg6: memref<32x1xf32, #tpu.memory_space<vmem>>) attributes {dimension_semantics = [#tpu.dimension_semantics<parallel>], iteration_bounds = array<i64: 1>, scalar_prefetch = 0 : i64, scratch_operands = 0 : i64, tpu.core_type = #tpu.core_type<tc>, window_params = [{transform_indices = @transform_0, window_bounds = array<i64: 32, 32>}, {pipeline_mode = #tpu.pipeline_mode<synchronous>, transform_indices = @transform_1, window_bounds = array<i64: 32, 512>}, {pipeline_mode = #tpu.pipeline_mode<synchronous>, transform_indices = @transform_2, window_bounds = array<i64: 1, 512>}, {pipeline_mode = #tpu.pipeline_mode<synchronous>, transform_indices = @transform_3, window_bounds = array<i64: 1, 512>}, {transform_indices = @transform_4, window_bounds = array<i64: 1, 1>}, {transform_indices = @transform_5, window_bounds = array<i64: 32, 1>}]} {
    %c0 = arith.constant 0 : index
    %c0_0 = arith.constant 0 : index
    %0 = vector.load %arg1[%c0, %c0_0] : memref<32x32xf32, #tpu.memory_space<vmem>>, vector<32x32xf32>
    %1 = arith.truncf %0 : vector<32x32xf32> to vector<32x32xbf16>
    %c0_1 = arith.constant 0 : index
    %c0_2 = arith.constant 0 : index
    %2 = vector.load %arg2[%c0_1, %c0_2] : memref<32x512xbf16, #tpu.memory_space<vmem>>, vector<32x512xbf16>
    %cst = arith.constant dense<0.000000e+00> : vector<32x512xf32>
    %3 = tpu.matmul %1, %2, %cst {dimension_numbers = #tpu.dot_dimension_numbers<[1], [0], [0], [1], [0, 0, 1, 1], [], []>} : vector<32x32xbf16>, vector<32x512xbf16>, vector<32x512xf32> -> vector<32x512xf32>
    %c0_3 = arith.constant 0 : index
    %c0_4 = arith.constant 0 : index
    %4 = vector.load %arg3[%c0_3, %c0_4] : memref<1x512xf32, #tpu.memory_space<vmem>>, vector<1x512xf32>
    %5 = vector.broadcast %4 : vector<1x512xf32> to vector<32x512xf32>
    %6 = arith.addf %3, %5 : vector<32x512xf32>
    %cst_5 = arith.constant 0.000000e+00 : f32
    %7 = vector.broadcast %cst_5 : f32 to vector<32x512xf32>
    %8 = arith.maximumf %6, %7 : vector<32x512xf32>
    %c0_6 = arith.constant 0 : index
    %c0_7 = arith.constant 0 : index
    %9 = vector.load %arg4[%c0_6, %c0_7] : memref<1x512xf32, #tpu.memory_space<vmem>>, vector<1x512xf32>
    %10 = vector.broadcast %9 : vector<1x512xf32> to vector<32x512xf32>
    %11 = arith.mulf %8, %10 : vector<32x512xf32>
    %cst_8 = arith.constant dense<0.000000e+00> : vector<32xf32>
    %12 = vector.multi_reduction <add>, %11, %cst_8 [1] : vector<32x512xf32> to vector<32xf32>
    %13 = vector.shape_cast %12 : vector<32xf32> to vector<32x1xf32>
    %c0_9 = arith.constant 0 : index
    %c0_10 = arith.constant 0 : index
    %14 = memref.load %arg5[%c0_9, %c0_10] : memref<1x1xf32, #tpu.memory_space<smem>>
    %15 = vector.broadcast %14 : f32 to vector<32x1xf32>
    %16 = arith.addf %13, %15 : vector<32x1xf32>
    %17 = arith.negf %16 : vector<32x1xf32>
    %18 = math.exp %17 : vector<32x1xf32>
    %cst_11 = arith.constant 1.000000e+00 : f32
    %19 = vector.broadcast %cst_11 : f32 to vector<32x1xf32>
    %20 = arith.addf %19, %18 : vector<32x1xf32>
    %21 = arith.divf %19, %20 : vector<32x1xf32>
    %c0_12 = arith.constant 0 : index
    %c0_13 = arith.constant 0 : index
    %22 = vector.load %arg6[%c0_12, %c0_13] : memref<32x1xf32, #tpu.memory_space<vmem>>, vector<32x1xf32>
    tpu.vector_store %arg6[%c0_12, %c0_13], %21 {strides = array<i32>} : memref<32x1xf32, #tpu.memory_space<vmem>>, vector<32x1xf32>,
    return
  }
  func.func @transform_0(%arg0: i32) -> (i32, i32) {
    %c0_i32 = arith.constant 0 : i32
    %c0_i32_0 = arith.constant 0 : i32
    return %arg0, %c0_i32 : i32, i32
  }
  func.func @transform_1(%arg0: i32) -> (i32, i32) {
    %c0_i32 = arith.constant 0 : i32
    %c0_i32_0 = arith.constant 0 : i32
    %c0_i32_1 = arith.constant 0 : i32
    return %c0_i32, %c0_i32_0 : i32, i32
  }
  func.func @transform_2(%arg0: i32) -> (i32, i32) {
    %c0_i32 = arith.constant 0 : i32
    %c0_i32_0 = arith.constant 0 : i32
    %c0_i32_1 = arith.constant 0 : i32
    return %c0_i32, %c0_i32_0 : i32, i32
  }
  func.func @transform_3(%arg0: i32) -> (i32, i32) {
    %c0_i32 = arith.constant 0 : i32
    %c0_i32_0 = arith.constant 0 : i32
    %c0_i32_1 = arith.constant 0 : i32
    return %c0_i32, %c0_i32_0 : i32, i32
  }
  func.func @transform_4(%arg0: i32) -> (i32, i32) {
    %c0_i32 = arith.constant 0 : i32
    %c0_i32_0 = arith.constant 0 : i32
    %c0_i32_1 = arith.constant 0 : i32
    return %c0_i32, %c0_i32_0 : i32, i32
  }
  func.func @transform_5(%arg0: i32) -> (i32, i32) {
    %c0_i32 = arith.constant 0 : i32
    %c0_i32_0 = arith.constant 0 : i32
    return %arg0, %c0_i32 : i32, i32
  }
}

</mosaic_0001>

<llo_original>
// kernel: tpu_custom_call.1
$region0: #{tpu_custom_call.1}
  #allocation0 [shape = 'u32[]', space=smem, size = 0x4, offset = 0x4, fixed_abs, tag = 'smem constant byte address 0x4 - core index']
  #allocation1 [shape = 'u32[144,128]{1,0:T(1,128)}', space=vmem, size = 0x12000, scoped, tag = 'internal scratch']
  #allocation2 [shape = 'f32[1,1]{1,0:T(1,128)S(6)}', space=smem, size = 0x200, scoped, tag = 'scoped memory for tpu_custom_call.1']
  %s0 = inlined_call_operand.hbm [shape: f32[32,32], index: 0, kind: input, shape index: {}]
  %s1 = inlined_call_operand.hbm [shape: bf16[32,512], index: 1, kind: input, shape index: {}]
  %s2 = inlined_call_operand.vmem [shape: f32[1,512], index: 2, kind: input, shape index: {}]
  %s3 = inlined_call_operand.vmem [shape: f32[1,512], index: 3, kind: input, shape index: {}]
  %s4 = inlined_call_operand.<no memory space> [shape: f32[1,1], index: 4, kind: input, shape index: {}]
  %s5 = inlined_call_operand.vmem [shape: f32[32,1], index: 5, kind: output, shape index: {}]
  %s6 = sld [smem:[#allocation0]]
  $region38: #{tpu_custom_call.1} parent=0
    _
  %s8 = ssub.s32 1, %s6
  %s9 = scalar_select 0, %s8, %s6
  %10 = sst [smem:[#allocation2]] %s4
  $region1: #{tpu_custom_call.1} parent=0
    #allocation3 [shape = 'u8[16384]{0}', space=vmem, size = 0x4000, scoped, tag = 'input window, operand 0, single buffered']
    #allocation4 [shape = 's32[1]{0}', space=sflag, size = 0x4, scoped, tag = 'scoped memory for tpu_custom_call.1']
    #allocation5 [shape = 'u8[32768]{0}', space=vmem, size = 0x8000, scoped, tag = 'input window, operand 1, single buffered']
    #allocation6 [shape = 's32[1]{0}', space=sflag, size = 0x4, scoped, tag = 'scoped memory for tpu_custom_call.1']
    %11 = vsyncpa [#allocation4], 0
    %12 = vsyncpa [#allocation6], 0
    // Predicated region
    $region2: #{tpu_custom_call.1} parent=1 // pred_check
      _
    $region3: #{tpu_custom_call.1} parent=1 // pred_check_branch
      %14 = sbr.rel (0) target = $region5
    $region4: #{tpu_custom_call.1} parent=1 // pred_region
      %s16 = ssub.s32 512, 512
      %17 = vsyncadd [#allocation4], %s16
      %s18 = sshll.u32 [#allocation3], 4
      %s19 = int_to_ptr.vmem [resolvable:$true] %s18
      %24 = dma.hbm_to_vmem [thread:$0]  %s0, 512, %s19, [#allocation4], 128, 128, 8
    $region5: #{tpu_custom_call.1} parent=1 // pred_fallthru
      _
    // Predicated region
    $region6: #{tpu_custom_call.1} parent=1 // pred_check
      _
    $region7: #{tpu_custom_call.1} parent=1 // pred_check_branch
      %26 = sbr.rel (0) target = $region9
    $region8: #{tpu_custom_call.1} parent=1 // pred_region
      %s28 = ssub.s32 1024, 1024
      %29 = vsyncadd [#allocation6], %s28
      %s30 = sshll.u32 [#allocation5], 4
      %s31 = int_to_ptr.vmem [resolvable:$true] %s30
      %36 = dma.hbm_to_vmem [thread:$0]  %s1, 1024, %s31, [#allocation6], 256, 256, 16
    $region9: #{tpu_custom_call.1} parent=1 // pred_fallthru
      _
    // Predicated region
    $region10: #{tpu_custom_call.1} parent=1 // pred_check
      _
    $region11: #{tpu_custom_call.1} parent=1 // pred_check_branch
      %38 = sbr.rel (0) target = $region13
    $region12: #{tpu_custom_call.1} parent=1 // pred_region
      _
    $region13: #{tpu_custom_call.1} parent=1 // pred_fallthru
      _
    // Predicated region
    $region14: #{tpu_custom_call.1} parent=1 // pred_check
      _
    $region15: #{tpu_custom_call.1} parent=1 // pred_check_branch
      %40 = sbr.rel (0) target = $region17
    $region16: #{tpu_custom_call.1} parent=1 // pred_region
      _
    $region17: #{tpu_custom_call.1} parent=1 // pred_fallthru
      _
    // Predicated region
    $region18: #{tpu_custom_call.1} parent=1 // pred_check
      _
    $region19: #{tpu_custom_call.1} parent=1 // pred_check_branch
      %42 = sbr.rel (0) target = $region21
    $region20: #{tpu_custom_call.1} parent=1 // pred_region
      _
    $region21: #{tpu_custom_call.1} parent=1 // pred_fallthru
      _
    // Predicated region
    $region22: #{tpu_custom_call.1} parent=1 // pred_check
      _
    $region23: #{tpu_custom_call.1} parent=1 // pred_check_branch
      %44 = sbr.rel (0) target = $region25
    $region24: #{tpu_custom_call.1} parent=1 // pred_region
      %45 = dma.done [#allocation4], 512
    $region25: #{tpu_custom_call.1} parent=1 // pred_fallthru
      _
    // Predicated region
    $region26: #{tpu_custom_call.1} parent=1 // pred_check
      _
    $region27: #{tpu_custom_call.1} parent=1 // pred_check_branch
      %47 = sbr.rel (0) target = $region29
    $region28: #{tpu_custom_call.1} parent=1 // pred_region
      %48 = dma.done [#allocation6], 1024
    $region29: #{tpu_custom_call.1} parent=1 // pred_fallthru
      _
    %v50 = vld [vmem:[#allocation3] sm:$0xff]
    %v51 = vld [vmem:[#allocation3 + $0x8] sm:$0xff]
    %v52 = vld [vmem:[#allocation3 + $0x10] sm:$0xff]
    %v53 = vld [vmem:[#allocation3 + $0x18] sm:$0xff]
    %v54 = vpack.c.bf16 %v51, %v50
    %v55 = vpack.c.bf16 %v53, %v52
    %v56 = vld [vmem:[#allocation5] sm:$0xff]
    %v57 = vld [vmem:[#allocation5 + $0x8] sm:$0xff]
    %v58 = vld [vmem:[#allocation5 + $0x10] sm:$0xff]
    %v59 = vld [vmem:[#allocation5 + $0x18] sm:$0xff]
    %v60 = vld [vmem:[#allocation5 + $0x20] sm:$0xff]
    %v61 = vld [vmem:[#allocation5 + $0x28] sm:$0xff]
    %v62 = vld [vmem:[#allocation5 + $0x30] sm:$0xff]
    %v63 = vld [vmem:[#allocation5 + $0x38] sm:$0xff]
    %v64 = vld [vmem:[%s2] sm:$0xf]
    %v66 = vlaneseq
    %v67 = vshrl.u32 %v66, 7
    %v68 = vsub.s32 0, %v67
    %v69 = vrot.slane %v64, %v68
    %v70 = vlaneseq
    %v71 = vshrl.u32 %v70, 7
    %v72 = vsub.s32 1, %v71
    %v73 = vrot.slane %v64, %v72
    %v74 = vlaneseq
    %v75 = vshrl.u32 %v74, 7
    %v76 = vsub.s32 2, %v75
    %v77 = vrot.slane %v64, %v76
    %v78 = vlaneseq
    %v79 = vshrl.u32 %v78, 7
    %v80 = vsub.s32 3, %v79
    %v81 = vrot.slane %v64, %v80
    %v94 = vunpack.c.l.b16 %v56
    %v95 = vunpack.c.h.b16 %v56
    %v96 = vunpack.c.l.b16 %v57
    %v97 = vunpack.c.h.b16 %v57
    %v98 = vunpack.c.l.b16 %v58
    %v99 = vunpack.c.h.b16 %v58
    %v100 = vunpack.c.l.b16 %v59
    %v101 = vunpack.c.h.b16 %v59
    %v102 = vunpack.c.l.b16 %v60
    %v103 = vunpack.c.h.b16 %v60
    %v104 = vunpack.c.l.b16 %v61
    %v105 = vunpack.c.h.b16 %v61
    %v106 = vunpack.c.l.b16 %v62
    %v107 = vunpack.c.h.b16 %v62
    %v108 = vunpack.c.l.b16 %v63
    %v109 = vunpack.c.h.b16 %v63
    %v110 = vpack.c.b16 %v98, %v94
    %v111 = vpack.c.b16 %v99, %v95
    %v112 = vpack.c.b16 %v100, %v96
    %v113 = vpack.c.b16 %v101, %v97
    %v114 = vpack.c.b16 %v106, %v102
    %v115 = vpack.c.b16 %v107, %v103
    %v116 = vpack.c.b16 %v108, %v104
    %v117 = vpack.c.b16 %v109, %v105
    %vm126 = vcmask 261120
    %v128 = vsel %vm126, %v54, 0
    %v131 = vsel %vm126, %v55, 0
    %133 = vmatprep.subr.bf16.mxu0 %v111
    %134 = vmatpush1.bf16.msra.mxu0 %v110
    %135 = vmatprep.subr.bf16.mxu0 %v115
    %136 = vmatpush1.bf16.msra.mxu0 %v114
    %137 = vmatprep.subr.bf16.mxu0 0
    %138 = vmatpush1.bf16.msra.mxu0 0
    %139 = vmatprep.subr.bf16.mxu0 0
    %140 = vmatpush1.bf16.msra.mxu0 0
    %141 = vmatprep.subr.bf16.mxu0 0
    %142 = vmatpush1.bf16.msra.mxu0 0
    %143 = vmatprep.subr.bf16.mxu0 0
    %144 = vmatpush1.bf16.msra.mxu0 0
    %145 = vmatprep.subr.bf16.mxu0 0
    %146 = vmatpush1.bf16.msra.mxu0 0
    %147 = vmatprep.subr.bf16.mxu0 0
    %148 = vmatpush1.bf16.msra.mxu0 0
    %149 = vmatprep.subr.bf16.mxu0 0
    %150 = vmatpush1.bf16.msra.mxu0 0
    %151 = vmatprep.subr.bf16.mxu0 0
    %152 = vmatpush1.bf16.msra.mxu0 0
    %153 = vmatprep.subr.bf16.mxu0 0
    %154 = vmatpush1.bf16.msra.mxu0 0
    %155 = vmatprep.subr.bf16.mxu0 0
    %156 = vmatpush1.bf16.msra.mxu0 0
    %157 = vmatprep.subr.bf16.mxu0 0
    %158 = vmatpush1.bf16.msra.mxu0 0
    %159 = vmatprep.subr.bf16.mxu0 0
    %160 = vmatpush1.bf16.msra.mxu0 0
    %161 = vmatprep.subr.bf16.mxu0 0
    %162 = vmatpush1.bf16.msra.mxu0 0
    %163 = vmatprep.subr.bf16.mxu0 0
    %164 = vmatpush1.bf16.msra.mxu0 0
    %165 = vmatprep.mubr.bf16.mxu0 0
    %166 = vmatmul.mubr.bf16.gmra.mrb[0].mxu0 %v128
    %v167 = vpop.f32.mrb[0].mxu0
    %v168 = vadd.f32 %v69, %v167
    %v169 = vpop.f32.mrb[0].mxu0
    %v170 = vadd.f32 %v73, %v169
    %v171 = vpop.f32.mrb[0].mxu0
    %v172 = vadd.f32 %v69, %v171
    %v173 = vpop.f32.mrb[0].mxu0
    %v174 = vadd.f32 %v73, %v173
    %175 = vmatprep.mubr.bf16.mxu0 0
    %176 = vmatmul.mubr.bf16.gmra.mrb[0].mxu0 %v131
    %v177 = vpop.f32.mrb[0].mxu0
    %v178 = vadd.f32 %v69, %v177
    %v179 = vpop.f32.mrb[0].mxu0
    %v180 = vadd.f32 %v73, %v179
    %v181 = vpop.f32.mrb[0].mxu0
    %v182 = vadd.f32 %v69, %v181
    %v183 = vpop.f32.mrb[0].mxu0
    %v184 = vadd.f32 %v73, %v183
    %185 = vdwg.mxu0
    %186 = vmatprep.subr.bf16.mxu0 %v113
    %187 = vmatpush1.bf16.msra.mxu0 %v112
    %188 = vmatprep.subr.bf16.mxu0 %v117
    %189 = vmatpush1.bf16.msra.mxu0 %v116
    %190 = vmatprep.subr.bf16.mxu0 0
    %191 = vmatpush1.bf16.msra.mxu0 0
    %192 = vmatprep.subr.bf16.mxu0 0
    %193 = vmatpush1.bf16.msra.mxu0 0
    %194 = vmatprep.subr.bf16.mxu0 0
    %195 = vmatpush1.bf16.msra.mxu0 0
    %196 = vmatprep.subr.bf16.mxu0 0
    %197 = vmatpush1.bf16.msra.mxu0 0
    %198 = vmatprep.subr.bf16.mxu0 0
    %199 = vmatpush1.bf16.msra.mxu0 0
    %200 = vmatprep.subr.bf16.mxu0 0
    %201 = vmatpush1.bf16.msra.mxu0 0
    %202 = vmatprep.subr.bf16.mxu0 0
    %203 = vmatpush1.bf16.msra.mxu0 0
    %204 = vmatprep.subr.bf16.mxu0 0
    %205 = vmatpush1.bf16.msra.mxu0 0
    %206 = vmatprep.subr.bf16.mxu0 0
    %207 = vmatpush1.bf16.msra.mxu0 0
    %208 = vmatprep.subr.bf16.mxu0 0
    %209 = vmatpush1.bf16.msra.mxu0 0
    %210 = vmatprep.subr.bf16.mxu0 0
    %211 = vmatpush1.bf16.msra.mxu0 0
    %212 = vmatprep.subr.bf16.mxu0 0
    %213 = vmatpush1.bf16.msra.mxu0 0
    %214 = vmatprep.subr.bf16.mxu0 0
    %215 = vmatpush1.bf16.msra.mxu0 0
    %216 = vmatprep.subr.bf16.mxu0 0
    %217 = vmatpush1.bf16.msra.mxu0 0
    %218 = vmatprep.mubr.bf16.mxu0 0
    %219 = vmatmul.mubr.bf16.gmra.mrb[0].mxu0 %v128
    %v220 = vpop.f32.mrb[0].mxu0
    %v221 = vadd.f32 %v77, %v220
    %v222 = vpop.f32.mrb[0].mxu0
    %v223 = vadd.f32 %v81, %v222
    %v224 = vpop.f32.mrb[0].mxu0
    %v225 = vadd.f32 %v77, %v224
    %v226 = vpop.f32.mrb[0].mxu0
    %v227 = vadd.f32 %v81, %v226
    %228 = vmatprep.mubr.bf16.mxu0 0
    %229 = vmatmul.mubr.bf16.gmra.mrb[0].mxu0 %v131
    %v230 = vpop.f32.mrb[0].mxu0
    %v231 = vadd.f32 %v77, %v230
    %v232 = vpop.f32.mrb[0].mxu0
    %v233 = vadd.f32 %v81, %v232
    %v234 = vpop.f32.mrb[0].mxu0
    %v235 = vadd.f32 %v77, %v234
    %v236 = vpop.f32.mrb[0].mxu0
    %v237 = vadd.f32 %v81, %v236
    %238 = vdwg.mxu0
    %v239 = vmax.f32 %v168, 0.0
    %v240 = vmax.f32 %v170, 0.0
    %v241 = vmax.f32 %v221, 0.0
    %v242 = vmax.f32 %v223, 0.0
    %v243 = vmax.f32 %v172, 0.0
    %v244 = vmax.f32 %v174, 0.0
    %v245 = vmax.f32 %v225, 0.0
    %v246 = vmax.f32 %v227, 0.0
    %v247 = vmax.f32 %v178, 0.0
    %v248 = vmax.f32 %v180, 0.0
    %v249 = vmax.f32 %v231, 0.0
    %v250 = vmax.f32 %v233, 0.0
    %v251 = vmax.f32 %v182, 0.0
    %v252 = vmax.f32 %v184, 0.0
    %v253 = vmax.f32 %v235, 0.0
    %v254 = vmax.f32 %v237, 0.0
    %v255 = vld [vmem:[%s3] sm:$0xf]
    %v257 = vlaneseq
    %v258 = vshrl.u32 %v257, 7
    %v259 = vsub.s32 0, %v258
    %v260 = vrot.slane %v255, %v259
    %v261 = vlaneseq
    %v262 = vshrl.u32 %v261, 7
    %v263 = vsub.s32 1, %v262
    %v264 = vrot.slane %v255, %v263
    %v265 = vlaneseq
    %v266 = vshrl.u32 %v265, 7
    %v267 = vsub.s32 2, %v266
    %v268 = vrot.slane %v255, %v267
    %v269 = vlaneseq
    %v270 = vshrl.u32 %v269, 7
    %v271 = vsub.s32 3, %v270
    %v272 = vrot.slane %v255, %v271
    %v277 = vmul.f32 %v239, %v260
    %v278 = vmul.f32 %v240, %v264
    %v279 = vmul.f32 %v241, %v268
    %v280 = vmul.f32 %v242, %v272
    %v281 = vmul.f32 %v243, %v260
    %v282 = vmul.f32 %v244, %v264
    %v283 = vmul.f32 %v245, %v268
    %v284 = vmul.f32 %v246, %v272
    %v285 = vmul.f32 %v247, %v260
    %v286 = vmul.f32 %v248, %v264
    %v287 = vmul.f32 %v249, %v268
    %v288 = vmul.f32 %v250, %v272
    %v289 = vmul.f32 %v251, %v260
    %v290 = vmul.f32 %v252, %v264
    %v291 = vmul.f32 %v253, %v268
    %v292 = vmul.f32 %v254, %v272
    %v293 = vadd.f32 %v277, %v278
    %v294 = vadd.f32 %v293, %v279
    %v295 = vadd.f32 %v294, %v280
    %296 = vadd.xlane.f32.xlu0 %v295
    %v297 = vpop.xlane.xlu0 %296
    %v298 = vadd.f32 %v281, %v282
    %v299 = vadd.f32 %v298, %v283
    %v300 = vadd.f32 %v299, %v284
    %301 = vadd.xlane.f32.xlu0 %v300
    %v302 = vpop.xlane.xlu0 %301
    %v303 = vadd.f32 %v285, %v286
    %v304 = vadd.f32 %v303, %v287
    %v305 = vadd.f32 %v304, %v288
    %306 = vadd.xlane.f32.xlu0 %v305
    %v307 = vpop.xlane.xlu0 %306
    %v308 = vadd.f32 %v289, %v290
    %v309 = vadd.f32 %v308, %v291
    %v310 = vadd.f32 %v309, %v292
    %311 = vadd.xlane.f32.xlu0 %v310
    %v312 = vpop.xlane.xlu0 %311
    %s313 = sld [smem:[#allocation2]]
    %v314 = vstv %s313
    %v315 = vadd.f32 %v297, %v314
    %v316 = vadd.f32 %v302, %v314
    %v317 = vadd.f32 %v307, %v314
    %v318 = vadd.f32 %v312, %v314
    %v319 = vxor.u32 %v315, 2147483648
    %v320 = vxor.u32 %v316, 2147483648
    %v321 = vxor.u32 %v317, 2147483648
    %v322 = vxor.u32 %v318, 2147483648
    %v323 = vmul.f32 %v319, 1.442695
    %v324 = vpow.pop %v323
    %v325 = vmul.f32 %v320, 1.442695
    %v326 = vpow.pop %v325
    %v327 = vmul.f32 %v321, 1.442695
    %v328 = vpow.pop %v327
    %v329 = vmul.f32 %v322, 1.442695
    %v330 = vpow.pop %v329
    %v331 = vadd.f32 %v324, 1.0
    %v332 = vadd.f32 %v326, 1.0
    %v333 = vadd.f32 %v328, 1.0
    %v334 = vadd.f32 %v330, 1.0
    %v335 = vrcp.pop %v331
    %v336 = vmul.f32 1.0, %v335
    %v337 = vrcp.pop %v332
    %v338 = vmul.f32 1.0, %v337
    %v339 = vrcp.pop %v333
    %v340 = vmul.f32 1.0, %v339
    %v341 = vrcp.pop %v334
    %v342 = vmul.f32 1.0, %v341
    %vm343 = vcmask 7168
    %344 = vst.msk [vmem:[%s5] sm:$0xff] %vm343, %v336
    %345 = vst.msk [vmem:[%s5 + $0x8] sm:$0xff] %vm343, %v338
    %346 = vst.msk [vmem:[%s5 + $0x10] sm:$0xff] %vm343, %v340
    %347 = vst.msk [vmem:[%s5 + $0x18] sm:$0xff] %vm343, %v342
    // Predicated region
    $region30: #{tpu_custom_call.1} parent=1 // pred_check
      _
    $region31: #{tpu_custom_call.1} parent=1 // pred_check_branch
      %349 = sbr.rel (0) target = $region33
    $region32: #{tpu_custom_call.1} parent=1 // pred_region
      _
    $region33: #{tpu_custom_call.1} parent=1 // pred_fallthru
      _
    // Predicated region
    $region34: #{tpu_custom_call.1} parent=1 // pred_check
      _
    $region35: #{tpu_custom_call.1} parent=1 // pred_check_branch
      %351 = sbr.rel (0) target = $region37
    $region36: #{tpu_custom_call.1} parent=1 // pred_region
      _
    $region37: #{tpu_custom_call.1} parent=1 // pred_fallthru
      _
    %352 = vsyncpa [#allocation4], 1
    %353 = vsyncpa [#allocation6], 1

</llo_original>
